<compile_context>
chip_gen: v7x
topology: tpu7x:2x2x1
jax: 0.10.0
libtpu: 0.0.40
codegen_flags: <defaults>
</compile_context>

<pallas_src>
import jax
import jax.numpy as jnp
from jax.experimental import pallas as pl
from jax.experimental.pallas import tpu as pltpu


def _round_up(x, m):
    return -(-x // m) * m


# ------------------------------ Fused kernel -------------------------------

def fused_cnn_kernel(x_ref, w1_ref, b1_ref, w2_ref, b2_ref, wf_ref, bl_ref,
                     out_ref):
    """Whole CNN forward for one batch tile.

    x_ref : (TB, L)        raw input tile (batch rows, length lanes)
    w1_ref: (3, C1)        conv1 taps (tap-major);  b1_ref: (1, C1)
    w2_ref: (3*C1, C2)     conv2 taps, row = k*C1 + c1;  b2_ref: (1, C2)
    wf_ref: (L4*C2, NP)    linear weight (flatten folded, lane-padded to NP)
    bl_ref: (1, NP)
    out_ref: (TB, NP)      lane-dense output tile
    """
    TB, L = x_ref.shape
    L2, L4 = L // 2, L // 4
    C1 = w1_ref.shape[1]

    x = x_ref[...]                                  # (TB, L)
    w1 = w1_ref[...]                                # (3, C1)
    b1 = b1_ref[...]                                # (1, C1)

    # ---- Stage 1: Conv1d(1->C1, k=3, p=1) + ReLU, one length position at a time.
    # Zero padding handled by skipping out-of-range taps (static Python ifs).
    def conv1_col(l):
        acc = x[:, l:l + 1] * w1[1:2, :] + b1       # center tap, lane-broadcast
        if l - 1 >= 0:
            acc = acc + x[:, l - 1:l] * w1[0:1, :]
        if l + 1 <= L - 1:
            acc = acc + x[:, l + 1:l + 2] * w1[2:3, :]
        return jnp.maximum(acc, 0.0)                # (TB, C1)

    # ---- MaxPool1d(2,2) fused into stage 1; build a zero-bordered slab so the
    # stage-2 +/-1 taps are aligned sublane slices.
    zpad = jnp.zeros((TB, C1), jnp.float32)
    pieces = [zpad]
    for j in range(L2):
        pieces.append(jnp.maximum(conv1_col(2 * j), conv1_col(2 * j + 1)))
    pieces.append(zpad)
    h1z = jnp.concatenate(pieces, axis=0)           # ((L2+2)*TB, C1), rows=(l2+1,b)

    # ---- Stage 2: Conv1d(C1->C2, k=3, p=1) as ONE K=3*C1 MXU matmul.
    h1cat = jnp.concatenate(
        [h1z[0:L2 * TB, :],                         # tap k=0  (l2-1)
         h1z[TB:(L2 + 1) * TB, :],                  # tap k=1  (l2)
         h1z[2 * TB:(L2 + 2) * TB, :]],             # tap k=2  (l2+1)
        axis=1)                                     # (L2*TB, 3*C1)
    h2 = jnp.dot(h1cat, w2_ref[...],
                 preferred_element_type=jnp.float32) + b2_ref[...]
    h2 = jnp.maximum(h2, 0.0)                       # (L2*TB, C2)

    # ---- MaxPool1d(2,2): adjacent length positions are adjacent TB-row blocks.
    pooled = []
    for j in range(L4):
        a = h2[(2 * j) * TB:(2 * j + 1) * TB, :]
        b = h2[(2 * j + 1) * TB:(2 * j + 2) * TB, :]
        pooled.append(jnp.maximum(a, b))            # (TB, C2)

    # ---- Flatten (folded into wf) + Linear as ONE K=L4*C2 matmul, lane-dense out.
    h2cat = jnp.concatenate(pooled, axis=1)         # (TB, L4*C2)
    out_ref[...] = (jnp.dot(h2cat, wf_ref[...],
                            preferred_element_type=jnp.float32) + bl_ref[...])


# ------------------------------ Forward pass -------------------------------

@jax.jit
def cnn_forward(x, params):
    """x: (B, input_dim) float32 (PyTorch forward unsqueezes the channel dim)."""
    w1, b1, w2, b2, wl, bl = params
    B, L = x.shape
    assert L % 4 == 0, "input_dim must be divisible by 4 (two MaxPool(2) layers)"
    L2, L4 = L // 2, L // 4
    C1, C2 = w1.shape[0], w2.shape[0]                # 16, 32
    N = wl.shape[0]

    # Batch tile: multiple of 8, <=128, and >=2 grid steps when B allows (v7x 2 TCs).
    B8 = _round_up(B, 8)
    TB = min(128, max(8, _round_up(B8 // 2, 8)))
    Bpad = _round_up(B, TB)

    # --- trace-time layout glue (tiny, one-shot XLA ops; no input transpose) ---
    xp = x.astype(jnp.float32)
    if Bpad > B:
        xp = jnp.pad(xp, ((0, Bpad - B), (0, 0)))                    # (Bpad, L)

    w1k = jnp.transpose(w1[:, 0, :]).astype(jnp.float32)             # (3, C1)
    b1r = b1.reshape(1, C1).astype(jnp.float32)
    # conv2: row index = k*C1 + c1 to match the in-kernel lane-concat of the 3 taps.
    w2c = jnp.transpose(w2, (2, 1, 0)).reshape(3 * C1, C2).astype(jnp.float32)
    b2r = b2.reshape(1, C2).astype(jnp.float32)

    # Linear: fold PyTorch channel-major flatten (feature = c2*L4 + l4) into the
    # weight, reorder rows to (l4*C2 + c2), and zero-pad outputs to NP lanes.
    NP = max(128, _round_up(N, 128))
    wf = jnp.transpose(wl.reshape(N, C2, L4), (2, 1, 0)).reshape(L4 * C2, N)
    wf = jnp.pad(wf.astype(jnp.float32), ((0, 0), (0, NP - N)))      # (L4*C2, NP)
    blr = jnp.pad(bl.reshape(1, N).astype(jnp.float32), ((0, 0), (0, NP - N)))

    # --- explicit VMEM budget (review: don't rely on the default scoped limit) ---
    lane_pad = lambda n: _round_up(max(n, 128), 128)
    sub_pad = lambda n: _round_up(max(n, 8), 8)
    est = 4 * (
        2 * TB * lane_pad(L)                                   # x tile, 2 buffers
        + 2 * TB * NP                                          # out tile, 2 buffers
        + 2 * (sub_pad(3) * lane_pad(C1) + sub_pad(1) * lane_pad(C1)
               + sub_pad(3 * C1) * lane_pad(C2) + sub_pad(1) * lane_pad(C2)
               + sub_pad(L4 * C2) * NP + sub_pad(1) * NP)      # weights, 2 buffers
        + 4 * (L2 + 2) * TB * lane_pad(3 * C1)                 # h1z/h1cat/h2 + slack
        + 2 * TB * lane_pad(L4 * C2))
    vmem_limit = int(min(64 * 1024 * 1024, max(16 * 1024 * 1024, 2 * est)))

    flops = Bpad * (2 * 3 * C1 * L + 2 * L2 * (3 * C1) * C2 + 2 * L4 * C2 * NP)
    bytes_accessed = 4 * (Bpad * L + 3 * C1 + C1 + 3 * C1 * C2 + C2
                          + L4 * C2 * NP + NP + Bpad * NP)

    out = pl.pallas_call(
        fused_cnn_kernel,
        out_shape=jax.ShapeDtypeStruct((Bpad, NP), jnp.float32),
        grid=(Bpad // TB,),
        in_specs=[
            pl.BlockSpec((TB, L), lambda i: (i, 0)),             # x tile (natural)
            pl.BlockSpec((3, C1), lambda i: (0, 0)),             # w1
            pl.BlockSpec((1, C1), lambda i: (0, 0)),             # b1
            pl.BlockSpec((3 * C1, C2), lambda i: (0, 0)),        # w2 (tap-fused)
            pl.BlockSpec((1, C2), lambda i: (0, 0)),             # b2
            pl.BlockSpec((L4 * C2, NP), lambda i: (0, 0)),       # linear (folded)
            pl.BlockSpec((1, NP), lambda i: (0, 0)),             # bias (padded)
        ],
        out_specs=pl.BlockSpec((TB, NP), lambda i: (i, 0)),      # lane-dense out
        compiler_params=pltpu.CompilerParams(
            dimension_semantics=("parallel",),
            vmem_limit_bytes=vmem_limit),
        cost_estimate=pl.CostEstimate(
            flops=flops, transcendentals=0, bytes_accessed=bytes_accessed),
    )(xp, w1k, b1r, w2c, b2r, wf, blr)

    return out[:B, :N]


# --------------------------- Pure-JAX reference ----------------------------

def ref_forward(x, params):
    w1, b1, w2, b2, wl, bl = params
    B, L = x.shape
    xc = x[:, None, :]                                               # (B,1,L)
    xpd = jnp.pad(xc, ((0, 0), (0, 0), (1, 1)))
    h = b1[None, :, None] + sum(
        jnp.einsum('oi,bil->bol', w1[:, :, k], xpd[:, :, k:k + L]) for k in range(3))
    h = jnp.maximum(h, 0.0)
    h = h.reshape(B, h.shape[1], L // 2, 2).max(-1)
    hp = jnp.pad(h, ((0, 0), (0, 0), (1, 1)))
    h2 = b2[None, :, None] + sum(
        jnp.einsum('oi,bil->bol', w2[:, :, k], hp[:, :, k:k + L // 2]) for k in range(3))
    h2 = jnp.maximum(h2, 0.0)
    h2 = h2.reshape(B, h2.shape[1], L // 4, 2).max(-1)
    return h2.reshape(B, -1) @ wl.T + bl


# ---------------------------------- Main -----------------------------------

if __name__ == "__main__":
    B = 2
    input_dim = 16
    num_classes = 4

    key = jax.random.PRNGKey(0)
    kx, k1, k2, k3, k4, k5, k6 = jax.random.split(key, 7)

    # Deterministic synthetic parameters (PyTorch-native shapes).
    w1 = (0.1 * jax.random.normal(k1, (16, 1, 3))).astype(jnp.float32)
    b1 = (0.1 * jax.random.normal(k2, (16,))).astype(jnp.float32)
    w2 = (0.1 * jax.random.normal(k3, (32, 16, 3))).astype(jnp.float32)
    b2 = (0.1 * jax.random.normal(k4, (32,))).astype(jnp.float32)
    wl = (0.1 * jax.random.normal(k5, (num_classes, 32 * (input_dim // 4)))).astype(jnp.float32)
    bl = (0.1 * jax.random.normal(k6, (num_classes,))).astype(jnp.float32)
    params = (w1, b1, w2, b2, wl, bl)

    x = jax.random.normal(kx, (B, input_dim), dtype=jnp.float32)

    out = jax.block_until_ready(cnn_forward(x, params))
    ref = jax.block_until_ready(ref_forward(x, params))

    assert out.shape == (B, num_classes)
    assert jnp.allclose(out, ref, rtol=1e-4, atol=1e-4), (out, ref)
    print("KERNEL_OK")
</pallas_src>

<mosaic_0001>
module attributes {stable_mosaic.version = 11 : i64} {
  func.func @fused_cnn_kernel(%arg0: i32, %arg1: memref<8x16xf32, #tpu.memory_space<vmem>>, %arg2: memref<3x16xf32, #tpu.memory_space<vmem>>, %arg3: memref<1x16xf32, #tpu.memory_space<vmem>>, %arg4: memref<48x32xf32, #tpu.memory_space<vmem>>, %arg5: memref<1x32xf32, #tpu.memory_space<vmem>>, %arg6: memref<128x128xf32, #tpu.memory_space<vmem>>, %arg7: memref<1x128xf32, #tpu.memory_space<vmem>>, %arg8: memref<8x128xf32, #tpu.memory_space<vmem>>) attributes {dimension_semantics = [#tpu.dimension_semantics<parallel>], iteration_bounds = array<i64: 1>, scalar_prefetch = 0 : i64, scratch_operands = 0 : i64, tpu.core_type = #tpu.core_type<tc>, window_params = [{transform_indices = @transform_0, window_bounds = array<i64: 8, 16>}, {pipeline_mode = #tpu.pipeline_mode<synchronous>, transform_indices = @transform_1, window_bounds = array<i64: 3, 16>}, {pipeline_mode = #tpu.pipeline_mode<synchronous>, transform_indices = @transform_2, window_bounds = array<i64: 1, 16>}, {pipeline_mode = #tpu.pipeline_mode<synchronous>, transform_indices = @transform_3, window_bounds = array<i64: 48, 32>}, {pipeline_mode = #tpu.pipeline_mode<synchronous>, transform_indices = @transform_4, window_bounds = array<i64: 1, 32>}, {pipeline_mode = #tpu.pipeline_mode<synchronous>, transform_indices = @transform_5, window_bounds = array<i64: 128, 128>}, {pipeline_mode = #tpu.pipeline_mode<synchronous>, transform_indices = @transform_6, window_bounds = array<i64: 1, 128>}, {transform_indices = @transform_7, window_bounds = array<i64: 8, 128>}]} {
    %c0 = arith.constant 0 : index
    %c0_0 = arith.constant 0 : index
    %0 = vector.load %arg1[%c0, %c0_0] : memref<8x16xf32, #tpu.memory_space<vmem>>, vector<8x16xf32>
    %c0_1 = arith.constant 0 : index
    %c0_2 = arith.constant 0 : index
    %1 = vector.load %arg2[%c0_1, %c0_2] : memref<3x16xf32, #tpu.memory_space<vmem>>, vector<3x16xf32>
    %c0_3 = arith.constant 0 : index
    %c0_4 = arith.constant 0 : index
    %2 = vector.load %arg3[%c0_3, %c0_4] : memref<1x16xf32, #tpu.memory_space<vmem>>, vector<1x16xf32>
    %cst = arith.constant 0.000000e+00 : f32
    %3 = vector.broadcast %cst : f32 to vector<8x16xf32>
    %4 = vector.extract_strided_slice %0 {offsets = [0, 0], sizes = [8, 1], strides = [1, 1]} : vector<8x16xf32> to vector<8x1xf32>
    %5 = vector.extract_strided_slice %1 {offsets = [1, 0], sizes = [1, 16], strides = [1, 1]} : vector<3x16xf32> to vector<1x16xf32>
    %6 = vector.broadcast %4 : vector<8x1xf32> to vector<8x16xf32>
    %7 = vector.broadcast %5 : vector<1x16xf32> to vector<8x16xf32>
    %8 = arith.mulf %6, %7 : vector<8x16xf32>
    %9 = vector.broadcast %2 : vector<1x16xf32> to vector<8x16xf32>
    %10 = arith.addf %8, %9 : vector<8x16xf32>
    %11 = vector.extract_strided_slice %0 {offsets = [0, 1], sizes = [8, 1], strides = [1, 1]} : vector<8x16xf32> to vector<8x1xf32>
    %12 = vector.extract_strided_slice %1 {offsets = [2, 0], sizes = [1, 16], strides = [1, 1]} : vector<3x16xf32> to vector<1x16xf32>
    %13 = vector.broadcast %11 : vector<8x1xf32> to vector<8x16xf32>
    %14 = vector.broadcast %12 : vector<1x16xf32> to vector<8x16xf32>
    %15 = arith.mulf %13, %14 : vector<8x16xf32>
    %16 = arith.addf %10, %15 : vector<8x16xf32>
    %cst_5 = arith.constant 0.000000e+00 : f32
    %17 = vector.broadcast %cst_5 : f32 to vector<8x16xf32>
    %18 = arith.maximumf %16, %17 : vector<8x16xf32>
    %19 = vector.extract_strided_slice %0 {offsets = [0, 1], sizes = [8, 1], strides = [1, 1]} : vector<8x16xf32> to vector<8x1xf32>
    %20 = vector.extract_strided_slice %1 {offsets = [1, 0], sizes = [1, 16], strides = [1, 1]} : vector<3x16xf32> to vector<1x16xf32>
    %21 = vector.broadcast %19 : vector<8x1xf32> to vector<8x16xf32>
    %22 = vector.broadcast %20 : vector<1x16xf32> to vector<8x16xf32>
    %23 = arith.mulf %21, %22 : vector<8x16xf32>
    %24 = vector.broadcast %2 : vector<1x16xf32> to vector<8x16xf32>
    %25 = arith.addf %23, %24 : vector<8x16xf32>
    %26 = vector.extract_strided_slice %0 {offsets = [0, 0], sizes = [8, 1], strides = [1, 1]} : vector<8x16xf32> to vector<8x1xf32>
    %27 = vector.extract_strided_slice %1 {offsets = [0, 0], sizes = [1, 16], strides = [1, 1]} : vector<3x16xf32> to vector<1x16xf32>
    %28 = vector.broadcast %26 : vector<8x1xf32> to vector<8x16xf32>
    %29 = vector.broadcast %27 : vector<1x16xf32> to vector<8x16xf32>
    %30 = arith.mulf %28, %29 : vector<8x16xf32>
    %31 = arith.addf %25, %30 : vector<8x16xf32>
    %32 = vector.extract_strided_slice %0 {offsets = [0, 2], sizes = [8, 1], strides = [1, 1]} : vector<8x16xf32> to vector<8x1xf32>
    %33 = vector.extract_strided_slice %1 {offsets = [2, 0], sizes = [1, 16], strides = [1, 1]} : vector<3x16xf32> to vector<1x16xf32>
    %34 = vector.broadcast %32 : vector<8x1xf32> to vector<8x16xf32>
    %35 = vector.broadcast %33 : vector<1x16xf32> to vector<8x16xf32>
    %36 = arith.mulf %34, %35 : vector<8x16xf32>
    %37 = arith.addf %31, %36 : vector<8x16xf32>
    %cst_6 = arith.constant 0.000000e+00 : f32
    %38 = vector.broadcast %cst_6 : f32 to vector<8x16xf32>
    %39 = arith.maximumf %37, %38 : vector<8x16xf32>
    %40 = arith.maximumf %18, %39 : vector<8x16xf32>
    %41 = vector.extract_strided_slice %0 {offsets = [0, 2], sizes = [8, 1], strides = [1, 1]} : vector<8x16xf32> to vector<8x1xf32>
    %42 = vector.extract_strided_slice %1 {offsets = [1, 0], sizes = [1, 16], strides = [1, 1]} : vector<3x16xf32> to vector<1x16xf32>
    %43 = vector.broadcast %41 : vector<8x1xf32> to vector<8x16xf32>
    %44 = vector.broadcast %42 : vector<1x16xf32> to vector<8x16xf32>
    %45 = arith.mulf %43, %44 : vector<8x16xf32>
    %46 = vector.broadcast %2 : vector<1x16xf32> to vector<8x16xf32>
    %47 = arith.addf %45, %46 : vector<8x16xf32>
    %48 = vector.extract_strided_slice %0 {offsets = [0, 1], sizes = [8, 1], strides = [1, 1]} : vector<8x16xf32> to vector<8x1xf32>
    %49 = vector.extract_strided_slice %1 {offsets = [0, 0], sizes = [1, 16], strides = [1, 1]} : vector<3x16xf32> to vector<1x16xf32>
    %50 = vector.broadcast %48 : vector<8x1xf32> to vector<8x16xf32>
    %51 = vector.broadcast %49 : vector<1x16xf32> to vector<8x16xf32>
    %52 = arith.mulf %50, %51 : vector<8x16xf32>
    %53 = arith.addf %47, %52 : vector<8x16xf32>
    %54 = vector.extract_strided_slice %0 {offsets = [0, 3], sizes = [8, 1], strides = [1, 1]} : vector<8x16xf32> to vector<8x1xf32>
    %55 = vector.extract_strided_slice %1 {offsets = [2, 0], sizes = [1, 16], strides = [1, 1]} : vector<3x16xf32> to vector<1x16xf32>
    %56 = vector.broadcast %54 : vector<8x1xf32> to vector<8x16xf32>
    %57 = vector.broadcast %55 : vector<1x16xf32> to vector<8x16xf32>
    %58 = arith.mulf %56, %57 : vector<8x16xf32>
    %59 = arith.addf %53, %58 : vector<8x16xf32>
    %cst_7 = arith.constant 0.000000e+00 : f32
    %60 = vector.broadcast %cst_7 : f32 to vector<8x16xf32>
    %61 = arith.maximumf %59, %60 : vector<8x16xf32>
    %62 = vector.extract_strided_slice %0 {offsets = [0, 3], sizes = [8, 1], strides = [1, 1]} : vector<8x16xf32> to vector<8x1xf32>
    %63 = vector.extract_strided_slice %1 {offsets = [1, 0], sizes = [1, 16], strides = [1, 1]} : vector<3x16xf32> to vector<1x16xf32>
    %64 = vector.broadcast %62 : vector<8x1xf32> to vector<8x16xf32>
    %65 = vector.broadcast %63 : vector<1x16xf32> to vector<8x16xf32>
    %66 = arith.mulf %64, %65 : vector<8x16xf32>
    %67 = vector.broadcast %2 : vector<1x16xf32> to vector<8x16xf32>
    %68 = arith.addf %66, %67 : vector<8x16xf32>
    %69 = vector.extract_strided_slice %0 {offsets = [0, 2], sizes = [8, 1], strides = [1, 1]} : vector<8x16xf32> to vector<8x1xf32>
    %70 = vector.extract_strided_slice %1 {offsets = [0, 0], sizes = [1, 16], strides = [1, 1]} : vector<3x16xf32> to vector<1x16xf32>
    %71 = vector.broadcast %69 : vector<8x1xf32> to vector<8x16xf32>
    %72 = vector.broadcast %70 : vector<1x16xf32> to vector<8x16xf32>
    %73 = arith.mulf %71, %72 : vector<8x16xf32>
    %74 = arith.addf %68, %73 : vector<8x16xf32>
    %75 = vector.extract_strided_slice %0 {offsets = [0, 4], sizes = [8, 1], strides = [1, 1]} : vector<8x16xf32> to vector<8x1xf32>
    %76 = vector.extract_strided_slice %1 {offsets = [2, 0], sizes = [1, 16], strides = [1, 1]} : vector<3x16xf32> to vector<1x16xf32>
    %77 = vector.broadcast %75 : vector<8x1xf32> to vector<8x16xf32>
    %78 = vector.broadcast %76 : vector<1x16xf32> to vector<8x16xf32>
    %79 = arith.mulf %77, %78 : vector<8x16xf32>
    %80 = arith.addf %74, %79 : vector<8x16xf32>
    %cst_8 = arith.constant 0.000000e+00 : f32
    %81 = vector.broadcast %cst_8 : f32 to vector<8x16xf32>
    %82 = arith.maximumf %80, %81 : vector<8x16xf32>
    %83 = arith.maximumf %61, %82 : vector<8x16xf32>
    %84 = vector.extract_strided_slice %0 {offsets = [0, 4], sizes = [8, 1], strides = [1, 1]} : vector<8x16xf32> to vector<8x1xf32>
    %85 = vector.extract_strided_slice %1 {offsets = [1, 0], sizes = [1, 16], strides = [1, 1]} : vector<3x16xf32> to vector<1x16xf32>
    %86 = vector.broadcast %84 : vector<8x1xf32> to vector<8x16xf32>
    %87 = vector.broadcast %85 : vector<1x16xf32> to vector<8x16xf32>
    %88 = arith.mulf %86, %87 : vector<8x16xf32>
    %89 = vector.broadcast %2 : vector<1x16xf32> to vector<8x16xf32>
    %90 = arith.addf %88, %89 : vector<8x16xf32>
    %91 = vector.extract_strided_slice %0 {offsets = [0, 3], sizes = [8, 1], strides = [1, 1]} : vector<8x16xf32> to vector<8x1xf32>
    %92 = vector.extract_strided_slice %1 {offsets = [0, 0], sizes = [1, 16], strides = [1, 1]} : vector<3x16xf32> to vector<1x16xf32>
    %93 = vector.broadcast %91 : vector<8x1xf32> to vector<8x16xf32>
    %94 = vector.broadcast %92 : vector<1x16xf32> to vector<8x16xf32>
    %95 = arith.mulf %93, %94 : vector<8x16xf32>
    %96 = arith.addf %90, %95 : vector<8x16xf32>
    %97 = vector.extract_strided_slice %0 {offsets = [0, 5], sizes = [8, 1], strides = [1, 1]} : vector<8x16xf32> to vector<8x1xf32>
    %98 = vector.extract_strided_slice %1 {offsets = [2, 0], sizes = [1, 16], strides = [1, 1]} : vector<3x16xf32> to vector<1x16xf32>
    %99 = vector.broadcast %97 : vector<8x1xf32> to vector<8x16xf32>
    %100 = vector.broadcast %98 : vector<1x16xf32> to vector<8x16xf32>
    %101 = arith.mulf %99, %100 : vector<8x16xf32>
    %102 = arith.addf %96, %101 : vector<8x16xf32>
    %cst_9 = arith.constant 0.000000e+00 : f32
    %103 = vector.broadcast %cst_9 : f32 to vector<8x16xf32>
    %104 = arith.maximumf %102, %103 : vector<8x16xf32>
    %105 = vector.extract_strided_slice %0 {offsets = [0, 5], sizes = [8, 1], strides = [1, 1]} : vector<8x16xf32> to vector<8x1xf32>
    %106 = vector.extract_strided_slice %1 {offsets = [1, 0], sizes = [1, 16], strides = [1, 1]} : vector<3x16xf32> to vector<1x16xf32>
    %107 = vector.broadcast %105 : vector<8x1xf32> to vector<8x16xf32>
    %108 = vector.broadcast %106 : vector<1x16xf32> to vector<8x16xf32>
    %109 = arith.mulf %107, %108 : vector<8x16xf32>
    %110 = vector.broadcast %2 : vector<1x16xf32> to vector<8x16xf32>
    %111 = arith.addf %109, %110 : vector<8x16xf32>
    %112 = vector.extract_strided_slice %0 {offsets = [0, 4], sizes = [8, 1], strides = [1, 1]} : vector<8x16xf32> to vector<8x1xf32>
    %113 = vector.extract_strided_slice %1 {offsets = [0, 0], sizes = [1, 16], strides = [1, 1]} : vector<3x16xf32> to vector<1x16xf32>
    %114 = vector.broadcast %112 : vector<8x1xf32> to vector<8x16xf32>
    %115 = vector.broadcast %113 : vector<1x16xf32> to vector<8x16xf32>
    %116 = arith.mulf %114, %115 : vector<8x16xf32>
    %117 = arith.addf %111, %116 : vector<8x16xf32>
    %118 = vector.extract_strided_slice %0 {offsets = [0, 6], sizes = [8, 1], strides = [1, 1]} : vector<8x16xf32> to vector<8x1xf32>
    %119 = vector.extract_strided_slice %1 {offsets = [2, 0], sizes = [1, 16], strides = [1, 1]} : vector<3x16xf32> to vector<1x16xf32>
    %120 = vector.broadcast %118 : vector<8x1xf32> to vector<8x16xf32>
    %121 = vector.broadcast %119 : vector<1x16xf32> to vector<8x16xf32>
    %122 = arith.mulf %120, %121 : vector<8x16xf32>
    %123 = arith.addf %117, %122 : vector<8x16xf32>
    %cst_10 = arith.constant 0.000000e+00 : f32
    %124 = vector.broadcast %cst_10 : f32 to vector<8x16xf32>
    %125 = arith.maximumf %123, %124 : vector<8x16xf32>
    %126 = arith.maximumf %104, %125 : vector<8x16xf32>
    %127 = vector.extract_strided_slice %0 {offsets = [0, 6], sizes = [8, 1], strides = [1, 1]} : vector<8x16xf32> to vector<8x1xf32>
    %128 = vector.extract_strided_slice %1 {offsets = [1, 0], sizes = [1, 16], strides = [1, 1]} : vector<3x16xf32> to vector<1x16xf32>
    %129 = vector.broadcast %127 : vector<8x1xf32> to vector<8x16xf32>
    %130 = vector.broadcast %128 : vector<1x16xf32> to vector<8x16xf32>
    %131 = arith.mulf %129, %130 : vector<8x16xf32>
    %132 = vector.broadcast %2 : vector<1x16xf32> to vector<8x16xf32>
    %133 = arith.addf %131, %132 : vector<8x16xf32>
    %134 = vector.extract_strided_slice %0 {offsets = [0, 5], sizes = [8, 1], strides = [1, 1]} : vector<8x16xf32> to vector<8x1xf32>
    %135 = vector.extract_strided_slice %1 {offsets = [0, 0], sizes = [1, 16], strides = [1, 1]} : vector<3x16xf32> to vector<1x16xf32>
    %136 = vector.broadcast %134 : vector<8x1xf32> to vector<8x16xf32>
    %137 = vector.broadcast %135 : vector<1x16xf32> to vector<8x16xf32>
    %138 = arith.mulf %136, %137 : vector<8x16xf32>
    %139 = arith.addf %133, %138 : vector<8x16xf32>
    %140 = vector.extract_strided_slice %0 {offsets = [0, 7], sizes = [8, 1], strides = [1, 1]} : vector<8x16xf32> to vector<8x1xf32>
    %141 = vector.extract_strided_slice %1 {offsets = [2, 0], sizes = [1, 16], strides = [1, 1]} : vector<3x16xf32> to vector<1x16xf32>
    %142 = vector.broadcast %140 : vector<8x1xf32> to vector<8x16xf32>
    %143 = vector.broadcast %141 : vector<1x16xf32> to vector<8x16xf32>
    %144 = arith.mulf %142, %143 : vector<8x16xf32>
    %145 = arith.addf %139, %144 : vector<8x16xf32>
    %cst_11 = arith.constant 0.000000e+00 : f32
    %146 = vector.broadcast %cst_11 : f32 to vector<8x16xf32>
    %147 = arith.maximumf %145, %146 : vector<8x16xf32>
    %148 = vector.extract_strided_slice %0 {offsets = [0, 7], sizes = [8, 1], strides = [1, 1]} : vector<8x16xf32> to vector<8x1xf32>
    %149 = vector.extract_strided_slice %1 {offsets = [1, 0], sizes = [1, 16], strides = [1, 1]} : vector<3x16xf32> to vector<1x16xf32>
    %150 = vector.broadcast %148 : vector<8x1xf32> to vector<8x16xf32>
    %151 = vector.broadcast %149 : vector<1x16xf32> to vector<8x16xf32>
    %152 = arith.mulf %150, %151 : vector<8x16xf32>
    %153 = vector.broadcast %2 : vector<1x16xf32> to vector<8x16xf32>
    %154 = arith.addf %152, %153 : vector<8x16xf32>
    %155 = vector.extract_strided_slice %0 {offsets = [0, 6], sizes = [8, 1], strides = [1, 1]} : vector<8x16xf32> to vector<8x1xf32>
    %156 = vector.extract_strided_slice %1 {offsets = [0, 0], sizes = [1, 16], strides = [1, 1]} : vector<3x16xf32> to vector<1x16xf32>
    %157 = vector.broadcast %155 : vector<8x1xf32> to vector<8x16xf32>
    %158 = vector.broadcast %156 : vector<1x16xf32> to vector<8x16xf32>
    %159 = arith.mulf %157, %158 : vector<8x16xf32>
    %160 = arith.addf %154, %159 : vector<8x16xf32>
    %161 = vector.extract_strided_slice %0 {offsets = [0, 8], sizes = [8, 1], strides = [1, 1]} : vector<8x16xf32> to vector<8x1xf32>
    %162 = vector.extract_strided_slice %1 {offsets = [2, 0], sizes = [1, 16], strides = [1, 1]} : vector<3x16xf32> to vector<1x16xf32>
    %163 = vector.broadcast %161 : vector<8x1xf32> to vector<8x16xf32>
    %164 = vector.broadcast %162 : vector<1x16xf32> to vector<8x16xf32>
    %165 = arith.mulf %163, %164 : vector<8x16xf32>
    %166 = arith.addf %160, %165 : vector<8x16xf32>
    %cst_12 = arith.constant 0.000000e+00 : f32
    %167 = vector.broadcast %cst_12 : f32 to vector<8x16xf32>
    %168 = arith.maximumf %166, %167 : vector<8x16xf32>
    %169 = arith.maximumf %147, %168 : vector<8x16xf32>
    %170 = vector.extract_strided_slice %0 {offsets = [0, 8], sizes = [8, 1], strides = [1, 1]} : vector<8x16xf32> to vector<8x1xf32>
    %171 = vector.extract_strided_slice %1 {offsets = [1, 0], sizes = [1, 16], strides = [1, 1]} : vector<3x16xf32> to vector<1x16xf32>
    %172 = vector.broadcast %170 : vector<8x1xf32> to vector<8x16xf32>
    %173 = vector.broadcast %171 : vector<1x16xf32> to vector<8x16xf32>
    %174 = arith.mulf %172, %173 : vector<8x16xf32>
    %175 = vector.broadcast %2 : vector<1x16xf32> to vector<8x16xf32>
    %176 = arith.addf %174, %175 : vector<8x16xf32>
    %177 = vector.extract_strided_slice %0 {offsets = [0, 7], sizes = [8, 1], strides = [1, 1]} : vector<8x16xf32> to vector<8x1xf32>
    %178 = vector.extract_strided_slice %1 {offsets = [0, 0], sizes = [1, 16], strides = [1, 1]} : vector<3x16xf32> to vector<1x16xf32>
    %179 = vector.broadcast %177 : vector<8x1xf32> to vector<8x16xf32>
    %180 = vector.broadcast %178 : vector<1x16xf32> to vector<8x16xf32>
    %181 = arith.mulf %179, %180 : vector<8x16xf32>
    %182 = arith.addf %176, %181 : vector<8x16xf32>
    %183 = vector.extract_strided_slice %0 {offsets = [0, 9], sizes = [8, 1], strides = [1, 1]} : vector<8x16xf32> to vector<8x1xf32>
    %184 = vector.extract_strided_slice %1 {offsets = [2, 0], sizes = [1, 16], strides = [1, 1]} : vector<3x16xf32> to vector<1x16xf32>
    %185 = vector.broadcast %183 : vector<8x1xf32> to vector<8x16xf32>
    %186 = vector.broadcast %184 : vector<1x16xf32> to vector<8x16xf32>
    %187 = arith.mulf %185, %186 : vector<8x16xf32>
    %188 = arith.addf %182, %187 : vector<8x16xf32>
    %cst_13 = arith.constant 0.000000e+00 : f32
    %189 = vector.broadcast %cst_13 : f32 to vector<8x16xf32>
    %190 = arith.maximumf %188, %189 : vector<8x16xf32>
    %191 = vector.extract_strided_slice %0 {offsets = [0, 9], sizes = [8, 1], strides = [1, 1]} : vector<8x16xf32> to vector<8x1xf32>
    %192 = vector.extract_strided_slice %1 {offsets = [1, 0], sizes = [1, 16], strides = [1, 1]} : vector<3x16xf32> to vector<1x16xf32>
    %193 = vector.broadcast %191 : vector<8x1xf32> to vector<8x16xf32>
    %194 = vector.broadcast %192 : vector<1x16xf32> to vector<8x16xf32>
    %195 = arith.mulf %193, %194 : vector<8x16xf32>
    %196 = vector.broadcast %2 : vector<1x16xf32> to vector<8x16xf32>
    %197 = arith.addf %195, %196 : vector<8x16xf32>
    %198 = vector.extract_strided_slice %0 {offsets = [0, 8], sizes = [8, 1], strides = [1, 1]} : vector<8x16xf32> to vector<8x1xf32>
    %199 = vector.extract_strided_slice %1 {offsets = [0, 0], sizes = [1, 16], strides = [1, 1]} : vector<3x16xf32> to vector<1x16xf32>
    %200 = vector.broadcast %198 : vector<8x1xf32> to vector<8x16xf32>
    %201 = vector.broadcast %199 : vector<1x16xf32> to vector<8x16xf32>
    %202 = arith.mulf %200, %201 : vector<8x16xf32>
    %203 = arith.addf %197, %202 : vector<8x16xf32>
    %204 = vector.extract_strided_slice %0 {offsets = [0, 10], sizes = [8, 1], strides = [1, 1]} : vector<8x16xf32> to vector<8x1xf32>
    %205 = vector.extract_strided_slice %1 {offsets = [2, 0], sizes = [1, 16], strides = [1, 1]} : vector<3x16xf32> to vector<1x16xf32>
    %206 = vector.broadcast %204 : vector<8x1xf32> to vector<8x16xf32>
    %207 = vector.broadcast %205 : vector<1x16xf32> to vector<8x16xf32>
    %208 = arith.mulf %206, %207 : vector<8x16xf32>
    %209 = arith.addf %203, %208 : vector<8x16xf32>
    %cst_14 = arith.constant 0.000000e+00 : f32
    %210 = vector.broadcast %cst_14 : f32 to vector<8x16xf32>
    %211 = arith.maximumf %209, %210 : vector<8x16xf32>
    %212 = arith.maximumf %190, %211 : vector<8x16xf32>
    %213 = vector.extract_strided_slice %0 {offsets = [0, 10], sizes = [8, 1], strides = [1, 1]} : vector<8x16xf32> to vector<8x1xf32>
    %214 = vector.extract_strided_slice %1 {offsets = [1, 0], sizes = [1, 16], strides = [1, 1]} : vector<3x16xf32> to vector<1x16xf32>
    %215 = vector.broadcast %213 : vector<8x1xf32> to vector<8x16xf32>
    %216 = vector.broadcast %214 : vector<1x16xf32> to vector<8x16xf32>
    %217 = arith.mulf %215, %216 : vector<8x16xf32>
    %218 = vector.broadcast %2 : vector<1x16xf32> to vector<8x16xf32>
    %219 = arith.addf %217, %218 : vector<8x16xf32>
    %220 = vector.extract_strided_slice %0 {offsets = [0, 9], sizes = [8, 1], strides = [1, 1]} : vector<8x16xf32> to vector<8x1xf32>
    %221 = vector.extract_strided_slice %1 {offsets = [0, 0], sizes = [1, 16], strides = [1, 1]} : vector<3x16xf32> to vector<1x16xf32>
    %222 = vector.broadcast %220 : vector<8x1xf32> to vector<8x16xf32>
    %223 = vector.broadcast %221 : vector<1x16xf32> to vector<8x16xf32>
    %224 = arith.mulf %222, %223 : vector<8x16xf32>
    %225 = arith.addf %219, %224 : vector<8x16xf32>
    %226 = vector.extract_strided_slice %0 {offsets = [0, 11], sizes = [8, 1], strides = [1, 1]} : vector<8x16xf32> to vector<8x1xf32>
    %227 = vector.extract_strided_slice %1 {offsets = [2, 0], sizes = [1, 16], strides = [1, 1]} : vector<3x16xf32> to vector<1x16xf32>
    %228 = vector.broadcast %226 : vector<8x1xf32> to vector<8x16xf32>
    %229 = vector.broadcast %227 : vector<1x16xf32> to vector<8x16xf32>
    %230 = arith.mulf %228, %229 : vector<8x16xf32>
    %231 = arith.addf %225, %230 : vector<8x16xf32>
    %cst_15 = arith.constant 0.000000e+00 : f32
    %232 = vector.broadcast %cst_15 : f32 to vector<8x16xf32>
    %233 = arith.maximumf %231, %232 : vector<8x16xf32>
    %234 = vector.extract_strided_slice %0 {offsets = [0, 11], sizes = [8, 1], strides = [1, 1]} : vector<8x16xf32> to vector<8x1xf32>
    %235 = vector.extract_strided_slice %1 {offsets = [1, 0], sizes = [1, 16], strides = [1, 1]} : vector<3x16xf32> to vector<1x16xf32>
    %236 = vector.broadcast %234 : vector<8x1xf32> to vector<8x16xf32>
    %237 = vector.broadcast %235 : vector<1x16xf32> to vector<8x16xf32>
    %238 = arith.mulf %236, %237 : vector<8x16xf32>
    %239 = vector.broadcast %2 : vector<1x16xf32> to vector<8x16xf32>
    %240 = arith.addf %238, %239 : vector<8x16xf32>
    %241 = vector.extract_strided_slice %0 {offsets = [0, 10], sizes = [8, 1], strides = [1, 1]} : vector<8x16xf32> to vector<8x1xf32>
    %242 = vector.extract_strided_slice %1 {offsets = [0, 0], sizes = [1, 16], strides = [1, 1]} : vector<3x16xf32> to vector<1x16xf32>
    %243 = vector.broadcast %241 : vector<8x1xf32> to vector<8x16xf32>
    %244 = vector.broadcast %242 : vector<1x16xf32> to vector<8x16xf32>
    %245 = arith.mulf %243, %244 : vector<8x16xf32>
    %246 = arith.addf %240, %245 : vector<8x16xf32>
    %247 = vector.extract_strided_slice %0 {offsets = [0, 12], sizes = [8, 1], strides = [1, 1]} : vector<8x16xf32> to vector<8x1xf32>
    %248 = vector.extract_strided_slice %1 {offsets = [2, 0], sizes = [1, 16], strides = [1, 1]} : vector<3x16xf32> to vector<1x16xf32>
    %249 = vector.broadcast %247 : vector<8x1xf32> to vector<8x16xf32>
    %250 = vector.broadcast %248 : vector<1x16xf32> to vector<8x16xf32>
    %251 = arith.mulf %249, %250 : vector<8x16xf32>
    %252 = arith.addf %246, %251 : vector<8x16xf32>
    %cst_16 = arith.constant 0.000000e+00 : f32
    %253 = vector.broadcast %cst_16 : f32 to vector<8x16xf32>
    %254 = arith.maximumf %252, %253 : vector<8x16xf32>
    %255 = arith.maximumf %233, %254 : vector<8x16xf32>
    %256 = vector.extract_strided_slice %0 {offsets = [0, 12], sizes = [8, 1], strides = [1, 1]} : vector<8x16xf32> to vector<8x1xf32>
    %257 = vector.extract_strided_slice %1 {offsets = [1, 0], sizes = [1, 16], strides = [1, 1]} : vector<3x16xf32> to vector<1x16xf32>
    %258 = vector.broadcast %256 : vector<8x1xf32> to vector<8x16xf32>
    %259 = vector.broadcast %257 : vector<1x16xf32> to vector<8x16xf32>
    %260 = arith.mulf %258, %259 : vector<8x16xf32>
    %261 = vector.broadcast %2 : vector<1x16xf32> to vector<8x16xf32>
    %262 = arith.addf %260, %261 : vector<8x16xf32>
    %263 = vector.extract_strided_slice %0 {offsets = [0, 11], sizes = [8, 1], strides = [1, 1]} : vector<8x16xf32> to vector<8x1xf32>
    %264 = vector.extract_strided_slice %1 {offsets = [0, 0], sizes = [1, 16], strides = [1, 1]} : vector<3x16xf32> to vector<1x16xf32>
    %265 = vector.broadcast %263 : vector<8x1xf32> to vector<8x16xf32>
    %266 = vector.broadcast %264 : vector<1x16xf32> to vector<8x16xf32>
    %267 = arith.mulf %265, %266 : vector<8x16xf32>
    %268 = arith.addf %262, %267 : vector<8x16xf32>
    %269 = vector.extract_strided_slice %0 {offsets = [0, 13], sizes = [8, 1], strides = [1, 1]} : vector<8x16xf32> to vector<8x1xf32>
    %270 = vector.extract_strided_slice %1 {offsets = [2, 0], sizes = [1, 16], strides = [1, 1]} : vector<3x16xf32> to vector<1x16xf32>
    %271 = vector.broadcast %269 : vector<8x1xf32> to vector<8x16xf32>
    %272 = vector.broadcast %270 : vector<1x16xf32> to vector<8x16xf32>
    %273 = arith.mulf %271, %272 : vector<8x16xf32>
    %274 = arith.addf %268, %273 : vector<8x16xf32>
    %cst_17 = arith.constant 0.000000e+00 : f32
    %275 = vector.broadcast %cst_17 : f32 to vector<8x16xf32>
    %276 = arith.maximumf %274, %275 : vector<8x16xf32>
    %277 = vector.extract_strided_slice %0 {offsets = [0, 13], sizes = [8, 1], strides = [1, 1]} : vector<8x16xf32> to vector<8x1xf32>
    %278 = vector.extract_strided_slice %1 {offsets = [1, 0], sizes = [1, 16], strides = [1, 1]} : vector<3x16xf32> to vector<1x16xf32>
    %279 = vector.broadcast %277 : vector<8x1xf32> to vector<8x16xf32>
    %280 = vector.broadcast %278 : vector<1x16xf32> to vector<8x16xf32>
    %281 = arith.mulf %279, %280 : vector<8x16xf32>
    %282 = vector.broadcast %2 : vector<1x16xf32> to vector<8x16xf32>
    %283 = arith.addf %281, %282 : vector<8x16xf32>
    %284 = vector.extract_strided_slice %0 {offsets = [0, 12], sizes = [8, 1], strides = [1, 1]} : vector<8x16xf32> to vector<8x1xf32>
    %285 = vector.extract_strided_slice %1 {offsets = [0, 0], sizes = [1, 16], strides = [1, 1]} : vector<3x16xf32> to vector<1x16xf32>
    %286 = vector.broadcast %284 : vector<8x1xf32> to vector<8x16xf32>
    %287 = vector.broadcast %285 : vector<1x16xf32> to vector<8x16xf32>
    %288 = arith.mulf %286, %287 : vector<8x16xf32>
    %289 = arith.addf %283, %288 : vector<8x16xf32>
    %290 = vector.extract_strided_slice %0 {offsets = [0, 14], sizes = [8, 1], strides = [1, 1]} : vector<8x16xf32> to vector<8x1xf32>
    %291 = vector.extract_strided_slice %1 {offsets = [2, 0], sizes = [1, 16], strides = [1, 1]} : vector<3x16xf32> to vector<1x16xf32>
    %292 = vector.broadcast %290 : vector<8x1xf32> to vector<8x16xf32>
    %293 = vector.broadcast %291 : vector<1x16xf32> to vector<8x16xf32>
    %294 = arith.mulf %292, %293 : vector<8x16xf32>
    %295 = arith.addf %289, %294 : vector<8x16xf32>
    %cst_18 = arith.constant 0.000000e+00 : f32
    %296 = vector.broadcast %cst_18 : f32 to vector<8x16xf32>
    %297 = arith.maximumf %295, %296 : vector<8x16xf32>
    %298 = arith.maximumf %276, %297 : vector<8x16xf32>
    %299 = vector.extract_strided_slice %0 {offsets = [0, 14], sizes = [8, 1], strides = [1, 1]} : vector<8x16xf32> to vector<8x1xf32>
    %300 = vector.extract_strided_slice %1 {offsets = [1, 0], sizes = [1, 16], strides = [1, 1]} : vector<3x16xf32> to vector<1x16xf32>
    %301 = vector.broadcast %299 : vector<8x1xf32> to vector<8x16xf32>
    %302 = vector.broadcast %300 : vector<1x16xf32> to vector<8x16xf32>
    %303 = arith.mulf %301, %302 : vector<8x16xf32>
    %304 = vector.broadcast %2 : vector<1x16xf32> to vector<8x16xf32>
    %305 = arith.addf %303, %304 : vector<8x16xf32>
    %306 = vector.extract_strided_slice %0 {offsets = [0, 13], sizes = [8, 1], strides = [1, 1]} : vector<8x16xf32> to vector<8x1xf32>
    %307 = vector.extract_strided_slice %1 {offsets = [0, 0], sizes = [1, 16], strides = [1, 1]} : vector<3x16xf32> to vector<1x16xf32>
    %308 = vector.broadcast %306 : vector<8x1xf32> to vector<8x16xf32>
    %309 = vector.broadcast %307 : vector<1x16xf32> to vector<8x16xf32>
    %310 = arith.mulf %308, %309 : vector<8x16xf32>
    %311 = arith.addf %305, %310 : vector<8x16xf32>
    %312 = vector.extract_strided_slice %0 {offsets = [0, 15], sizes = [8, 1], strides = [1, 1]} : vector<8x16xf32> to vector<8x1xf32>
    %313 = vector.extract_strided_slice %1 {offsets = [2, 0], sizes = [1, 16], strides = [1, 1]} : vector<3x16xf32> to vector<1x16xf32>
    %314 = vector.broadcast %312 : vector<8x1xf32> to vector<8x16xf32>
    %315 = vector.broadcast %313 : vector<1x16xf32> to vector<8x16xf32>
    %316 = arith.mulf %314, %315 : vector<8x16xf32>
    %317 = arith.addf %311, %316 : vector<8x16xf32>
    %cst_19 = arith.constant 0.000000e+00 : f32
    %318 = vector.broadcast %cst_19 : f32 to vector<8x16xf32>
    %319 = arith.maximumf %317, %318 : vector<8x16xf32>
    %320 = vector.extract_strided_slice %0 {offsets = [0, 15], sizes = [8, 1], strides = [1, 1]} : vector<8x16xf32> to vector<8x1xf32>
    %321 = vector.extract_strided_slice %1 {offsets = [1, 0], sizes = [1, 16], strides = [1, 1]} : vector<3x16xf32> to vector<1x16xf32>
    %322 = vector.broadcast %320 : vector<8x1xf32> to vector<8x16xf32>
    %323 = vector.broadcast %321 : vector<1x16xf32> to vector<8x16xf32>
    %324 = arith.mulf %322, %323 : vector<8x16xf32>
    %325 = vector.broadcast %2 : vector<1x16xf32> to vector<8x16xf32>
    %326 = arith.addf %324, %325 : vector<8x16xf32>
    %327 = vector.extract_strided_slice %0 {offsets = [0, 14], sizes = [8, 1], strides = [1, 1]} : vector<8x16xf32> to vector<8x1xf32>
    %328 = vector.extract_strided_slice %1 {offsets = [0, 0], sizes = [1, 16], strides = [1, 1]} : vector<3x16xf32> to vector<1x16xf32>
    %329 = vector.broadcast %327 : vector<8x1xf32> to vector<8x16xf32>
    %330 = vector.broadcast %328 : vector<1x16xf32> to vector<8x16xf32>
    %331 = arith.mulf %329, %330 : vector<8x16xf32>
    %332 = arith.addf %326, %331 : vector<8x16xf32>
    %cst_20 = arith.constant 0.000000e+00 : f32
    %333 = vector.broadcast %cst_20 : f32 to vector<8x16xf32>
    %334 = arith.maximumf %332, %333 : vector<8x16xf32>
    %335 = arith.maximumf %319, %334 : vector<8x16xf32>
    %336 = tpu.concatenate %3, %40, %83, %126, %169, %212, %255, %298, %335, %3 in 0 : vector<8x16xf32>, vector<8x16xf32>, vector<8x16xf32>, vector<8x16xf32>, vector<8x16xf32>, vector<8x16xf32>, vector<8x16xf32>, vector<8x16xf32>, vector<8x16xf32>, vector<8x16xf32> -> vector<80x16xf32>
    %337 = vector.extract_strided_slice %336 {offsets = [0, 0], sizes = [64, 16], strides = [1, 1]} : vector<80x16xf32> to vector<64x16xf32>
    %338 = vector.extract_strided_slice %336 {offsets = [8, 0], sizes = [64, 16], strides = [1, 1]} : vector<80x16xf32> to vector<64x16xf32>
    %339 = vector.extract_strided_slice %336 {offsets = [16, 0], sizes = [64, 16], strides = [1, 1]} : vector<80x16xf32> to vector<64x16xf32>
    %340 = tpu.concatenate %337, %338, %339 in 1 : vector<64x16xf32>, vector<64x16xf32>, vector<64x16xf32> -> vector<64x48xf32>
    %c0_21 = arith.constant 0 : index
    %c0_22 = arith.constant 0 : index
    %341 = vector.load %arg4[%c0_21, %c0_22] : memref<48x32xf32, #tpu.memory_space<vmem>>, vector<48x32xf32>
    %cst_23 = arith.constant dense<0.000000e+00> : vector<64x32xf32>
    %342 = tpu.matmul %340, %341, %cst_23 {dimension_numbers = #tpu.dot_dimension_numbers<[1], [0], [0], [1], [0, 0, 1, 1], [], []>} : vector<64x48xf32>, vector<48x32xf32>, vector<64x32xf32> -> vector<64x32xf32>
    %c0_24 = arith.constant 0 : index
    %c0_25 = arith.constant 0 : index
    %343 = vector.load %arg5[%c0_24, %c0_25] : memref<1x32xf32, #tpu.memory_space<vmem>>, vector<1x32xf32>
    %344 = vector.broadcast %343 : vector<1x32xf32> to vector<64x32xf32>
    %345 = arith.addf %342, %344 : vector<64x32xf32>
    %cst_26 = arith.constant 0.000000e+00 : f32
    %346 = vector.broadcast %cst_26 : f32 to vector<64x32xf32>
    %347 = arith.maximumf %345, %346 : vector<64x32xf32>
    %348 = vector.extract_strided_slice %347 {offsets = [0, 0], sizes = [8, 32], strides = [1, 1]} : vector<64x32xf32> to vector<8x32xf32>
    %349 = vector.extract_strided_slice %347 {offsets = [8, 0], sizes = [8, 32], strides = [1, 1]} : vector<64x32xf32> to vector<8x32xf32>
    %350 = arith.maximumf %348, %349 : vector<8x32xf32>
    %351 = vector.extract_strided_slice %347 {offsets = [16, 0], sizes = [8, 32], strides = [1, 1]} : vector<64x32xf32> to vector<8x32xf32>
    %352 = vector.extract_strided_slice %347 {offsets = [24, 0], sizes = [8, 32], strides = [1, 1]} : vector<64x32xf32> to vector<8x32xf32>
    %353 = arith.maximumf %351, %352 : vector<8x32xf32>
    %354 = vector.extract_strided_slice %347 {offsets = [32, 0], sizes = [8, 32], strides = [1, 1]} : vector<64x32xf32> to vector<8x32xf32>
    %355 = vector.extract_strided_slice %347 {offsets = [40, 0], sizes = [8, 32], strides = [1, 1]} : vector<64x32xf32> to vector<8x32xf32>
    %356 = arith.maximumf %354, %355 : vector<8x32xf32>
    %357 = vector.extract_strided_slice %347 {offsets = [48, 0], sizes = [8, 32], strides = [1, 1]} : vector<64x32xf32> to vector<8x32xf32>
    %358 = vector.extract_strided_slice %347 {offsets = [56, 0], sizes = [8, 32], strides = [1, 1]} : vector<64x32xf32> to vector<8x32xf32>
    %359 = arith.maximumf %357, %358 : vector<8x32xf32>
    %360 = tpu.concatenate %350, %353, %356, %359 in 1 : vector<8x32xf32>, vector<8x32xf32>, vector<8x32xf32>, vector<8x32xf32> -> vector<8x128xf32>
    %c0_27 = arith.constant 0 : index
    %c0_28 = arith.constant 0 : index
    %361 = vector.load %arg6[%c0_27, %c0_28] : memref<128x128xf32, #tpu.memory_space<vmem>>, vector<128x128xf32>
    %cst_29 = arith.constant dense<0.000000e+00> : vector<8x128xf32>
    %362 = tpu.matmul %360, %361, %cst_29 {dimension_numbers = #tpu.dot_dimension_numbers<[1], [0], [0], [1], [0, 0, 1, 1], [], []>} : vector<8x128xf32>, vector<128x128xf32>, vector<8x128xf32> -> vector<8x128xf32>
    %c0_30 = arith.constant 0 : index
    %c0_31 = arith.constant 0 : index
    %363 = vector.load %arg7[%c0_30, %c0_31] : memref<1x128xf32, #tpu.memory_space<vmem>>, vector<1x128xf32>
    %364 = vector.broadcast %363 : vector<1x128xf32> to vector<8x128xf32>
    %365 = arith.addf %362, %364 : vector<8x128xf32>
    %c0_32 = arith.constant 0 : index
    %c0_33 = arith.constant 0 : index
    %366 = vector.load %arg8[%c0_32, %c0_33] : memref<8x128xf32, #tpu.memory_space<vmem>>, vector<8x128xf32>
    tpu.vector_store %arg8[%c0_32, %c0_33], %365 {strides = array<i32>} : memref<8x128xf32, #tpu.memory_space<vmem>>, vector<8x128xf32>,
    return
  }
  func.func @transform_0(%arg0: i32) -> (i32, i32) {
    %c0_i32 = arith.constant 0 : i32
    %c0_i32_0 = arith.constant 0 : i32
    return %arg0, %c0_i32 : i32, i32
  }
  func.func @transform_1(%arg0: i32) -> (i32, i32) {
    %c0_i32 = arith.constant 0 : i32
    %c0_i32_0 = arith.constant 0 : i32
    %c0_i32_1 = arith.constant 0 : i32
    return %c0_i32, %c0_i32_0 : i32, i32
  }
  func.func @transform_2(%arg0: i32) -> (i32, i32) {
    %c0_i32 = arith.constant 0 : i32
    %c0_i32_0 = arith.constant 0 : i32
    %c0_i32_1 = arith.constant 0 : i32
    return %c0_i32, %c0_i32_0 : i32, i32
  }
  func.func @transform_3(%arg0: i32) -> (i32, i32) {
    %c0_i32 = arith.constant 0 : i32
    %c0_i32_0 = arith.constant 0 : i32
    %c0_i32_1 = arith.constant 0 : i32
    return %c0_i32, %c0_i32_0 : i32, i32
  }
  func.func @transform_4(%arg0: i32) -> (i32, i32) {
    %c0_i32 = arith.constant 0 : i32
    %c0_i32_0 = arith.constant 0 : i32
    %c0_i32_1 = arith.constant 0 : i32
    return %c0_i32, %c0_i32_0 : i32, i32
  }
  func.func @transform_5(%arg0: i32) -> (i32, i32) {
    %c0_i32 = arith.constant 0 : i32
    %c0_i32_0 = arith.constant 0 : i32
    %c0_i32_1 = arith.constant 0 : i32
    return %c0_i32, %c0_i32_0 : i32, i32
  }
  func.func @transform_6(%arg0: i32) -> (i32, i32) {
    %c0_i32 = arith.constant 0 : i32
    %c0_i32_0 = arith.constant 0 : i32
    %c0_i32_1 = arith.constant 0 : i32
    return %c0_i32, %c0_i32_0 : i32, i32
  }
  func.func @transform_7(%arg0: i32) -> (i32, i32) {
    %c0_i32 = arith.constant 0 : i32
    %c0_i32_0 = arith.constant 0 : i32
    return %arg0, %c0_i32 : i32, i32
  }
}

</mosaic_0001>

<llo_original>
// kernel: cnn_forward.1
$region0: #{cnn_forward.1}
  #allocation0 [shape = 'u32[]', space=smem, size = 0x4, offset = 0x4, fixed_abs, tag = 'smem constant byte address 0x4 - core index']
  #allocation1 [shape = 'u32[144,128]{1,0:T(1,128)}', space=vmem, size = 0x12000, scoped, tag = 'internal scratch']
  %s0 = inlined_call_operand.vmem [shape: f32[8,16], index: 0, kind: input, shape index: {}]
  %s1 = inlined_call_operand.vmem [shape: f32[3,16], index: 1, kind: input, shape index: {}]
  %s2 = inlined_call_operand.vmem [shape: f32[1,16], index: 2, kind: input, shape index: {}]
  %s3 = inlined_call_operand.vmem [shape: f32[48,32], index: 3, kind: input, shape index: {}]
  %s4 = inlined_call_operand.vmem [shape: f32[1,32], index: 4, kind: input, shape index: {}]
  %s5 = inlined_call_operand.vmem [shape: f32[128,128], index: 5, kind: input, shape index: {}]
  %s6 = inlined_call_operand.vmem [shape: f32[1,128], index: 6, kind: input, shape index: {}]
  %s7 = inlined_call_operand.vmem [shape: f32[8,128], index: 7, kind: output, shape index: {}]
  %s8 = sld [smem:[#allocation0]]
  $region38: #{cnn_forward.1} parent=0
    _
  %s10 = ssub.s32 1, %s8
  %s11 = scalar_select 0, %s10, %s8
  // Predicated region
  $region2: #{cnn_forward.1} parent=0 // pred_check
    _
  $region3: #{cnn_forward.1} parent=0 // pred_check_branch
    %13 = sbr.rel (0) target = $region5
  $region4: #{cnn_forward.1} parent=0 // pred_region
    _
  $region5: #{cnn_forward.1} parent=0 // pred_fallthru
    _
  // Predicated region
  $region6: #{cnn_forward.1} parent=0 // pred_check
    _
  $region7: #{cnn_forward.1} parent=0 // pred_check_branch
    %15 = sbr.rel (0) target = $region9
  $region8: #{cnn_forward.1} parent=0 // pred_region
    _
  $region9: #{cnn_forward.1} parent=0 // pred_fallthru
    _
  // Predicated region
  $region10: #{cnn_forward.1} parent=0 // pred_check
    _
  $region11: #{cnn_forward.1} parent=0 // pred_check_branch
    %17 = sbr.rel (0) target = $region13
  $region12: #{cnn_forward.1} parent=0 // pred_region
    _
  $region13: #{cnn_forward.1} parent=0 // pred_fallthru
    _
  // Predicated region
  $region14: #{cnn_forward.1} parent=0 // pred_check
    _
  $region15: #{cnn_forward.1} parent=0 // pred_check_branch
    %19 = sbr.rel (0) target = $region17
  $region16: #{cnn_forward.1} parent=0 // pred_region
    _
  $region17: #{cnn_forward.1} parent=0 // pred_fallthru
    _
  // Predicated region
  $region18: #{cnn_forward.1} parent=0 // pred_check
    _
  $region19: #{cnn_forward.1} parent=0 // pred_check_branch
    %21 = sbr.rel (0) target = $region21
  $region20: #{cnn_forward.1} parent=0 // pred_region
    _
  $region21: #{cnn_forward.1} parent=0 // pred_fallthru
    _
  // Predicated region
  $region22: #{cnn_forward.1} parent=0 // pred_check
    _
  $region23: #{cnn_forward.1} parent=0 // pred_check_branch
    %23 = sbr.rel (0) target = $region25
  $region24: #{cnn_forward.1} parent=0 // pred_region
    _
  $region25: #{cnn_forward.1} parent=0 // pred_fallthru
    _
  // Predicated region
  $region26: #{cnn_forward.1} parent=0 // pred_check
    _
  $region27: #{cnn_forward.1} parent=0 // pred_check_branch
    %25 = sbr.rel (0) target = $region29
  $region28: #{cnn_forward.1} parent=0 // pred_region
    _
  $region29: #{cnn_forward.1} parent=0 // pred_fallthru
    _
  %v26 = vld [vmem:[%s0] sm:$0xff]
  %v27 = vld [vmem:[%s1] sm:$0x7]
  %v28 = vld [vmem:[%s2] sm:$0x1]
  %30 = vset.pattern.permute.xlu0 0
  %31 = vperm.xlu0 %30, %v26
  %v32 = vpop.permute.xlu0 %31
  %v34 = vlaneseq
  %v35 = vshrl.u32 %v34, 7
  %v36 = vsub.s32 1, %v35
  %v37 = vrot.slane %v27, %v36
  %v38 = vmul.f32 %v32, %v37
  %v40 = vlaneseq
  %v41 = vshrl.u32 %v40, 7
  %v42 = vsub.s32 0, %v41
  %v43 = vrot.slane %v28, %v42
  %v45 = vadd.f32 %v38, %v43
  %46 = vset.pattern.permute.xlu0 1
  %47 = vperm.xlu0 %46, %v26
  %v48 = vpop.permute.xlu0 %47
  %v50 = vlaneseq
  %v51 = vshrl.u32 %v50, 7
  %v52 = vsub.s32 2, %v51
  %v53 = vrot.slane %v27, %v52
  %v54 = vmul.f32 %v48, %v53
  %v55 = vadd.f32 %v45, %v54
  %v56 = vmax.f32 %v55, 0.0
  %v57 = vmul.f32 %v48, %v37
  %v58 = vadd.f32 %v57, %v43
  %v59 = vlaneseq
  %v60 = vshrl.u32 %v59, 7
  %v61 = vsub.s32 0, %v60
  %v62 = vrot.slane %v27, %v61
  %v63 = vmul.f32 %v32, %v62
  %v64 = vadd.f32 %v58, %v63
  %65 = vset.pattern.permute.xlu0 2
  %66 = vperm.xlu0 %65, %v26
  %v67 = vpop.permute.xlu0 %66
  %v69 = vmul.f32 %v67, %v53
  %v70 = vadd.f32 %v64, %v69
  %v71 = vmax.f32 %v70, 0.0
  %v72 = vmax.f32 %v56, %v71
  %v73 = vmul.f32 %v67, %v37
  %v74 = vadd.f32 %v73, %v43
  %v75 = vmul.f32 %v48, %v62
  %v76 = vadd.f32 %v74, %v75
  %77 = vset.pattern.permute.xlu0 3
  %78 = vperm.xlu0 %77, %v26
  %v79 = vpop.permute.xlu0 %78
  %v81 = vmul.f32 %v79, %v53
  %v82 = vadd.f32 %v76, %v81
  %v83 = vmax.f32 %v82, 0.0
  %v84 = vmul.f32 %v79, %v37
  %v85 = vadd.f32 %v84, %v43
  %v86 = vmul.f32 %v67, %v62
  %v87 = vadd.f32 %v85, %v86
  %88 = vset.pattern.permute.xlu0 4
  %89 = vperm.xlu0 %88, %v26
  %v90 = vpop.permute.xlu0 %89
  %v92 = vmul.f32 %v90, %v53
  %v93 = vadd.f32 %v87, %v92
  %v94 = vmax.f32 %v93, 0.0
  %v95 = vmax.f32 %v83, %v94
  %v96 = vmul.f32 %v90, %v37
  %v97 = vadd.f32 %v96, %v43
  %v98 = vmul.f32 %v79, %v62
  %v99 = vadd.f32 %v97, %v98
  %100 = vset.pattern.permute.xlu0 5
  %101 = vperm.xlu0 %100, %v26
  %v102 = vpop.permute.xlu0 %101
  %v104 = vmul.f32 %v102, %v53
  %v105 = vadd.f32 %v99, %v104
  %v106 = vmax.f32 %v105, 0.0
  %v107 = vmul.f32 %v102, %v37
  %v108 = vadd.f32 %v107, %v43
  %v109 = vmul.f32 %v90, %v62
  %v110 = vadd.f32 %v108, %v109
  %111 = vset.pattern.permute.xlu0 6
  %112 = vperm.xlu0 %111, %v26
  %v113 = vpop.permute.xlu0 %112
  %v115 = vmul.f32 %v113, %v53
  %v116 = vadd.f32 %v110, %v115
  %v117 = vmax.f32 %v116, 0.0
  %v118 = vmax.f32 %v106, %v117
  %v119 = vmul.f32 %v113, %v37
  %v120 = vadd.f32 %v119, %v43
  %v121 = vmul.f32 %v102, %v62
  %v122 = vadd.f32 %v120, %v121
  %123 = vset.pattern.permute.xlu0 7
  %124 = vperm.xlu0 %123, %v26
  %v125 = vpop.permute.xlu0 %124
  %v127 = vmul.f32 %v125, %v53
  %v128 = vadd.f32 %v122, %v127
  %v129 = vmax.f32 %v128, 0.0
  %v130 = vmul.f32 %v125, %v37
  %v131 = vadd.f32 %v130, %v43
  %v132 = vmul.f32 %v113, %v62
  %v133 = vadd.f32 %v131, %v132
  %134 = vset.pattern.permute.xlu0 8
  %135 = vperm.xlu0 %134, %v26
  %v136 = vpop.permute.xlu0 %135
  %v138 = vmul.f32 %v136, %v53
  %v139 = vadd.f32 %v133, %v138
  %v140 = vmax.f32 %v139, 0.0
  %v141 = vmax.f32 %v129, %v140
  %v142 = vmul.f32 %v136, %v37
  %v143 = vadd.f32 %v142, %v43
  %v144 = vmul.f32 %v125, %v62
  %v145 = vadd.f32 %v143, %v144
  %146 = vset.pattern.permute.xlu0 9
  %147 = vperm.xlu0 %146, %v26
  %v148 = vpop.permute.xlu0 %147
  %v150 = vmul.f32 %v148, %v53
  %v151 = vadd.f32 %v145, %v150
  %v152 = vmax.f32 %v151, 0.0
  %v153 = vmul.f32 %v148, %v37
  %v154 = vadd.f32 %v153, %v43
  %v155 = vmul.f32 %v136, %v62
  %v156 = vadd.f32 %v154, %v155
  %157 = vset.pattern.permute.xlu0 10
  %158 = vperm.xlu0 %157, %v26
  %v159 = vpop.permute.xlu0 %158
  %v161 = vmul.f32 %v159, %v53
  %v162 = vadd.f32 %v156, %v161
  %v163 = vmax.f32 %v162, 0.0
  %v164 = vmax.f32 %v152, %v163
  %v165 = vmul.f32 %v159, %v37
  %v166 = vadd.f32 %v165, %v43
  %v167 = vmul.f32 %v148, %v62
  %v168 = vadd.f32 %v166, %v167
  %169 = vset.pattern.permute.xlu0 11
  %170 = vperm.xlu0 %169, %v26
  %v171 = vpop.permute.xlu0 %170
  %v173 = vmul.f32 %v171, %v53
  %v174 = vadd.f32 %v168, %v173
  %v175 = vmax.f32 %v174, 0.0
  %v176 = vmul.f32 %v171, %v37
  %v177 = vadd.f32 %v176, %v43
  %v178 = vmul.f32 %v159, %v62
  %v179 = vadd.f32 %v177, %v178
  %180 = vset.pattern.permute.xlu0 12
  %181 = vperm.xlu0 %180, %v26
  %v182 = vpop.permute.xlu0 %181
  %v184 = vmul.f32 %v182, %v53
  %v185 = vadd.f32 %v179, %v184
  %v186 = vmax.f32 %v185, 0.0
  %v187 = vmax.f32 %v175, %v186
  %v188 = vmul.f32 %v182, %v37
  %v189 = vadd.f32 %v188, %v43
  %v190 = vmul.f32 %v171, %v62
  %v191 = vadd.f32 %v189, %v190
  %192 = vset.pattern.permute.xlu0 13
  %193 = vperm.xlu0 %192, %v26
  %v194 = vpop.permute.xlu0 %193
  %v196 = vmul.f32 %v194, %v53
  %v197 = vadd.f32 %v191, %v196
  %v198 = vmax.f32 %v197, 0.0
  %v199 = vmul.f32 %v194, %v37
  %v200 = vadd.f32 %v199, %v43
  %v201 = vmul.f32 %v182, %v62
  %v202 = vadd.f32 %v200, %v201
  %203 = vset.pattern.permute.xlu0 14
  %204 = vperm.xlu0 %203, %v26
  %v205 = vpop.permute.xlu0 %204
  %v207 = vmul.f32 %v205, %v53
  %v208 = vadd.f32 %v202, %v207
  %v209 = vmax.f32 %v208, 0.0
  %v210 = vmax.f32 %v198, %v209
  %v211 = vmul.f32 %v205, %v37
  %v212 = vadd.f32 %v211, %v43
  %v213 = vmul.f32 %v194, %v62
  %v214 = vadd.f32 %v212, %v213
  %215 = vset.pattern.permute.xlu0 15
  %216 = vperm.xlu0 %215, %v26
  %v217 = vpop.permute.xlu0 %216
  %v219 = vmul.f32 %v217, %v53
  %v220 = vadd.f32 %v214, %v219
  %v221 = vmax.f32 %v220, 0.0
  %v222 = vmul.f32 %v217, %v37
  %v223 = vadd.f32 %v222, %v43
  %v224 = vmul.f32 %v205, %v62
  %v225 = vadd.f32 %v223, %v224
  %v226 = vmax.f32 %v225, 0.0
  %v227 = vmax.f32 %v221, %v226
  %236 = vrot.lane.b32.xlu0 %v72, 16
  %v237 = vpop.permute.xlu0 %236
  %238 = vrot.lane.b32.xlu0 %v95, 16
  %v239 = vpop.permute.xlu0 %238
  %240 = vrot.lane.b32.xlu0 %v118, 16
  %v241 = vpop.permute.xlu0 %240
  %242 = vrot.lane.b32.xlu0 %v141, 16
  %v243 = vpop.permute.xlu0 %242
  %244 = vrot.lane.b32.xlu0 %v164, 16
  %v245 = vpop.permute.xlu0 %244
  %246 = vrot.lane.b32.xlu0 %v187, 16
  %v247 = vpop.permute.xlu0 %246
  %248 = vrot.lane.b32.xlu0 %v210, 16
  %v249 = vpop.permute.xlu0 %248
  %250 = vrot.lane.b32.xlu0 %v227, 16
  %v251 = vpop.permute.xlu0 %250
  %261 = vrot.lane.b32.xlu0 %v95, 32
  %v262 = vpop.permute.xlu0 %261
  %263 = vrot.lane.b32.xlu0 %v118, 32
  %v264 = vpop.permute.xlu0 %263
  %265 = vrot.lane.b32.xlu0 %v141, 32
  %v266 = vpop.permute.xlu0 %265
  %267 = vrot.lane.b32.xlu0 %v164, 32
  %v268 = vpop.permute.xlu0 %267
  %269 = vrot.lane.b32.xlu0 %v187, 32
  %v270 = vpop.permute.xlu0 %269
  %271 = vrot.lane.b32.xlu0 %v210, 32
  %v272 = vpop.permute.xlu0 %271
  %273 = vrot.lane.b32.xlu0 %v227, 32
  %v274 = vpop.permute.xlu0 %273
  %275 = vrot.lane.b32.xlu0 0.0, 32
  %v276 = vpop.permute.xlu0 %275
  %vm285 = vcmask 130048
  %v286 = vsel %vm285, 0.0, %v237
  %v287 = vsel %vm285, %v72, %v239
  %v288 = vsel %vm285, %v95, %v241
  %v289 = vsel %vm285, %v118, %v243
  %v290 = vsel %vm285, %v141, %v245
  %v291 = vsel %vm285, %v164, %v247
  %v292 = vsel %vm285, %v187, %v249
  %v293 = vsel %vm285, %v210, %v251
  %vm294 = vcmask 261120
  %v295 = vsel %vm294, %v286, %v262
  %v296 = vsel %vm294, %v287, %v264
  %v297 = vsel %vm294, %v288, %v266
  %v298 = vsel %vm294, %v289, %v268
  %v299 = vsel %vm294, %v290, %v270
  %v300 = vsel %vm294, %v291, %v272
  %v301 = vsel %vm294, %v292, %v274
  %v302 = vsel %vm294, %v293, %v276
  %v303 = vld [vmem:[%s3] sm:$0xff]
  %v304 = vld [vmem:[%s3 + $0x8] sm:$0xff]
  %v305 = vld [vmem:[%s3 + $0x10] sm:$0xff]
  %v306 = vld [vmem:[%s3 + $0x18] sm:$0xff]
  %v307 = vld [vmem:[%s3 + $0x20] sm:$0xff]
  %v308 = vld [vmem:[%s3 + $0x28] sm:$0xff]
  %v309 = vld [vmem:[%s4] sm:$0x1]
  %v311 = vlaneseq
  %v312 = vshrl.u32 %v311, 7
  %v313 = vsub.s32 0, %v312
  %v314 = vrot.slane %v309, %v313
  %vm316 = vcmask 392192
  %v318 = vsel %vm316, %v295, 0
  %v321 = vsel %vm316, %v296, 0
  %v324 = vsel %vm316, %v297, 0
  %v327 = vsel %vm316, %v298, 0
  %v330 = vsel %vm316, %v299, 0
  %v333 = vsel %vm316, %v300, 0
  %v336 = vsel %vm316, %v301, 0
  %v339 = vsel %vm316, %v302, 0
  %341 = vmatprep.subr.mxu0 0.0
  %342 = vmatpush1.msra.mxu0 %v303
  %343 = vmatprep.subr.mxu0 0.0
  %344 = vmatpush1.msra.mxu0 %v304
  %345 = vmatprep.subr.mxu0 0.0
  %346 = vmatpush1.msra.mxu0 %v305
  %347 = vmatprep.subr.mxu0 0.0
  %348 = vmatpush1.msra.mxu0 %v306
  %349 = vmatprep.subr.mxu0 0.0
  %350 = vmatpush1.msra.mxu0 %v307
  %351 = vmatprep.subr.mxu0 0.0
  %352 = vmatpush1.msra.mxu0 %v308
  %353 = vmatprep.subr.mxu0 0.0
  %354 = vmatpush1.msra.mxu0 0.0
  %355 = vmatprep.subr.mxu0 0.0
  %356 = vmatpush1.msra.mxu0 0.0
  %357 = vmatprep.subr.mxu0 0.0
  %358 = vmatpush1.msra.mxu0 0.0
  %359 = vmatprep.subr.mxu0 0.0
  %360 = vmatpush1.msra.mxu0 0.0
  %361 = vmatprep.subr.mxu0 0.0
  %362 = vmatpush1.msra.mxu0 0.0
  %363 = vmatprep.subr.mxu0 0.0
  %364 = vmatpush1.msra.mxu0 0.0
  %365 = vmatprep.subr.mxu0 0.0
  %366 = vmatpush1.msra.mxu0 0.0
  %367 = vmatprep.subr.mxu0 0.0
  %368 = vmatpush1.msra.mxu0 0.0
  %369 = vmatprep.subr.mxu0 0.0
  %370 = vmatpush1.msra.mxu0 0.0
  %371 = vmatprep.subr.mxu0 0.0
  %372 = vmatpush1.msra.mxu0 0.0
  %373 = vmatprep.subr.mxu0 0.0
  %374 = vmatpush1.msra.mxu0 0.0
  %375 = vmatprep.subr.mxu0 0.0
  %376 = vmatpush1.msra.mxu0 0.0
  %377 = vmatprep.subr.mxu0 0.0
  %378 = vmatpush1.msra.mxu0 0.0
  %379 = vmatprep.subr.mxu0 0.0
  %380 = vmatpush1.msra.mxu0 0.0
  %381 = vmatprep.subr.mxu0 0.0
  %382 = vmatpush1.msra.mxu0 0.0
  %383 = vmatprep.subr.mxu0 0.0
  %384 = vmatpush1.msra.mxu0 0.0
  %385 = vmatprep.subr.mxu0 0.0
  %386 = vmatpush1.msra.mxu0 0.0
  %387 = vmatprep.subr.mxu0 0.0
  %388 = vmatpush1.msra.mxu0 0.0
  %389 = vmatprep.subr.mxu0 0.0
  %390 = vmatpush1.msra.mxu0 0.0
  %391 = vmatprep.subr.mxu0 0.0
  %392 = vmatpush1.msra.mxu0 0.0
  %393 = vmatprep.subr.mxu0 0.0
  %394 = vmatpush1.msra.mxu0 0.0
  %395 = vmatprep.subr.mxu0 0.0
  %396 = vmatpush1.msra.mxu0 0.0
  %397 = vmatprep.subr.mxu0 0.0
  %398 = vmatpush1.msra.mxu0 0.0
  %399 = vmatprep.subr.mxu0 0.0
  %400 = vmatpush1.msra.mxu0 0.0
  %401 = vmatprep.subr.mxu0 0.0
  %402 = vmatpush1.msra.mxu0 0.0
  %403 = vmatprep.subr.mxu0 0.0
  %404 = vmatpush1.msra.mxu0 0.0
  %405 = vmatprep.mubr.f32.mxu0 0.0
  %406 = vmatmul.mubr.f32.gmra.mrb[0].mxu0 %v318
  %v407 = vpop.f32.mrb[0].mxu0
  %v408 = vadd.f32 %v314, %v407
  %v409 = vpop.f32.mrb[0].mxu0
  %410 = vmatprep.mubr.f32.mxu0 0.0
  %411 = vmatmul.mubr.f32.gmra.mrb[0].mxu0 %v321
  %v412 = vpop.f32.mrb[0].mxu0
  %v413 = vadd.f32 %v314, %v412
  %v414 = vpop.f32.mrb[0].mxu0
  %415 = vmatprep.mubr.f32.mxu0 0.0
  %416 = vmatmul.mubr.f32.gmra.mrb[0].mxu0 %v324
  %v417 = vpop.f32.mrb[0].mxu0
  %v418 = vadd.f32 %v314, %v417
  %v419 = vpop.f32.mrb[0].mxu0
  %420 = vmatprep.mubr.f32.mxu0 0.0
  %421 = vmatmul.mubr.f32.gmra.mrb[0].mxu0 %v327
  %v422 = vpop.f32.mrb[0].mxu0
  %v423 = vadd.f32 %v314, %v422
  %v424 = vpop.f32.mrb[0].mxu0
  %425 = vmatprep.mubr.f32.mxu0 0.0
  %426 = vmatmul.mubr.f32.gmra.mrb[0].mxu0 %v330
  %v427 = vpop.f32.mrb[0].mxu0
  %v428 = vadd.f32 %v314, %v427
  %v429 = vpop.f32.mrb[0].mxu0
  %430 = vmatprep.mubr.f32.mxu0 0.0
  %431 = vmatmul.mubr.f32.gmra.mrb[0].mxu0 %v333
  %v432 = vpop.f32.mrb[0].mxu0
  %v433 = vadd.f32 %v314, %v432
  %v434 = vpop.f32.mrb[0].mxu0
  %435 = vmatprep.mubr.f32.mxu0 0.0
  %436 = vmatmul.mubr.f32.gmra.mrb[0].mxu0 %v336
  %v437 = vpop.f32.mrb[0].mxu0
  %v438 = vadd.f32 %v314, %v437
  %v439 = vpop.f32.mrb[0].mxu0
  %440 = vmatprep.mubr.f32.mxu0 0.0
  %441 = vmatmul.mubr.f32.gmra.mrb[0].mxu0 %v339
  %v442 = vpop.f32.mrb[0].mxu0
  %v443 = vadd.f32 %v314, %v442
  %v444 = vpop.f32.mrb[0].mxu0
  %445 = vdwg.mxu0
  %v446 = vmax.f32 %v408, 0.0
  %v447 = vmax.f32 %v413, 0.0
  %v448 = vmax.f32 %v418, 0.0
  %v449 = vmax.f32 %v423, 0.0
  %v450 = vmax.f32 %v428, 0.0
  %v451 = vmax.f32 %v433, 0.0
  %v452 = vmax.f32 %v438, 0.0
  %v453 = vmax.f32 %v443, 0.0
  %v454 = vmax.f32 %v446, %v447
  %v455 = vmax.f32 %v448, %v449
  %v456 = vmax.f32 %v450, %v451
  %v457 = vmax.f32 %v452, %v453
  %459 = vrot.lane.b32.xlu0 %v455, 32
  %v460 = vpop.permute.xlu0 %459
  %463 = vrot.lane.b32.xlu0 %v456, 64
  %v464 = vpop.permute.xlu0 %463
  %467 = vrot.lane.b32.xlu0 %v457, 96
  %v468 = vpop.permute.xlu0 %467
  %v470 = vsel %vm294, %v454, %v460
  %vm471 = vcmask 523264
  %v472 = vsel %vm471, %v470, %v464
  %vm473 = vcmask 785408
  %v474 = vsel %vm473, %v472, %v468
  %v475 = vld [vmem:[%s5] sm:$0xff]
  %v476 = vld [vmem:[%s5 + $0x8] sm:$0xff]
  %v477 = vld [vmem:[%s5 + $0x10] sm:$0xff]
  %v478 = vld [vmem:[%s5 + $0x18] sm:$0xff]
  %v479 = vld [vmem:[%s5 + $0x20] sm:$0xff]
  %v480 = vld [vmem:[%s5 + $0x28] sm:$0xff]
  %v481 = vld [vmem:[%s5 + $0x30] sm:$0xff]
  %v482 = vld [vmem:[%s5 + $0x38] sm:$0xff]
  %v483 = vld [vmem:[%s5 + $0x40] sm:$0xff]
  %v484 = vld [vmem:[%s5 + $0x48] sm:$0xff]
  %v485 = vld [vmem:[%s5 + $0x50] sm:$0xff]
  %v486 = vld [vmem:[%s5 + $0x58] sm:$0xff]
  %v487 = vld [vmem:[%s5 + $0x60] sm:$0xff]
  %v488 = vld [vmem:[%s5 + $0x68] sm:$0xff]
  %v489 = vld [vmem:[%s5 + $0x70] sm:$0xff]
  %v490 = vld [vmem:[%s5 + $0x78] sm:$0xff]
  %v491 = vld [vmem:[%s6] sm:$0x1]
  %v493 = vlaneseq
  %v494 = vshrl.u32 %v493, 7
  %v495 = vsub.s32 0, %v494
  %v496 = vrot.slane %v491, %v495
  %498 = vmatprep.subr.mxu0 0.0
  %499 = vmatpush1.msra.mxu0 %v475
  %500 = vmatprep.subr.mxu0 0.0
  %501 = vmatpush1.msra.mxu0 %v476
  %502 = vmatprep.subr.mxu0 0.0
  %503 = vmatpush1.msra.mxu0 %v477
  %504 = vmatprep.subr.mxu0 0.0
  %505 = vmatpush1.msra.mxu0 %v478
  %506 = vmatprep.subr.mxu0 0.0
  %507 = vmatpush1.msra.mxu0 %v479
  %508 = vmatprep.subr.mxu0 0.0
  %509 = vmatpush1.msra.mxu0 %v480
  %510 = vmatprep.subr.mxu0 0.0
  %511 = vmatpush1.msra.mxu0 %v481
  %512 = vmatprep.subr.mxu0 0.0
  %513 = vmatpush1.msra.mxu0 %v482
  %514 = vmatprep.subr.mxu0 0.0
  %515 = vmatpush1.msra.mxu0 %v483
  %516 = vmatprep.subr.mxu0 0.0
  %517 = vmatpush1.msra.mxu0 %v484
  %518 = vmatprep.subr.mxu0 0.0
  %519 = vmatpush1.msra.mxu0 %v485
  %520 = vmatprep.subr.mxu0 0.0
  %521 = vmatpush1.msra.mxu0 %v486
  %522 = vmatprep.subr.mxu0 0.0
  %523 = vmatpush1.msra.mxu0 %v487
  %524 = vmatprep.subr.mxu0 0.0
  %525 = vmatpush1.msra.mxu0 %v488
  %526 = vmatprep.subr.mxu0 0.0
  %527 = vmatpush1.msra.mxu0 %v489
  %528 = vmatprep.subr.mxu0 0.0
  %529 = vmatpush1.msra.mxu0 %v490
  %530 = vmatprep.subr.mxu0 0.0
  %531 = vmatpush1.msra.mxu0 0.0
  %532 = vmatprep.subr.mxu0 0.0
  %533 = vmatpush1.msra.mxu0 0.0
  %534 = vmatprep.subr.mxu0 0.0
  %535 = vmatpush1.msra.mxu0 0.0
  %536 = vmatprep.subr.mxu0 0.0
  %537 = vmatpush1.msra.mxu0 0.0
  %538 = vmatprep.subr.mxu0 0.0
  %539 = vmatpush1.msra.mxu0 0.0
  %540 = vmatprep.subr.mxu0 0.0
  %541 = vmatpush1.msra.mxu0 0.0
  %542 = vmatprep.subr.mxu0 0.0
  %543 = vmatpush1.msra.mxu0 0.0
  %544 = vmatprep.subr.mxu0 0.0
  %545 = vmatpush1.msra.mxu0 0.0
  %546 = vmatprep.subr.mxu0 0.0
  %547 = vmatpush1.msra.mxu0 0.0
  %548 = vmatprep.subr.mxu0 0.0
  %549 = vmatpush1.msra.mxu0 0.0
  %550 = vmatprep.subr.mxu0 0.0
  %551 = vmatpush1.msra.mxu0 0.0
  %552 = vmatprep.subr.mxu0 0.0
  %553 = vmatpush1.msra.mxu0 0.0
  %554 = vmatprep.subr.mxu0 0.0
  %555 = vmatpush1.msra.mxu0 0.0
  %556 = vmatprep.subr.mxu0 0.0
  %557 = vmatpush1.msra.mxu0 0.0
  %558 = vmatprep.subr.mxu0 0.0
  %559 = vmatpush1.msra.mxu0 0.0
  %560 = vmatprep.subr.mxu0 0.0
  %561 = vmatpush1.msra.mxu0 0.0
  %562 = vmatprep.mubr.f32.mxu0 0.0
  %563 = vmatmul.mubr.f32.gmra.mrb[0].mxu0 %v474
  %v564 = vpop.f32.mrb[0].mxu0
  %v565 = vadd.f32 %v496, %v564
  %v566 = vpop.f32.mrb[0].mxu0
  %567 = vdwg.mxu0
  %568 = vst [vmem:[%s7] sm:$0xff] %v565
  // Predicated region
  $region30: #{cnn_forward.1} parent=0 // pred_check
    _
  $region31: #{cnn_forward.1} parent=0 // pred_check_branch
    %570 = sbr.rel (0) target = $region33
  $region32: #{cnn_forward.1} parent=0 // pred_region
    _
  $region33: #{cnn_forward.1} parent=0 // pred_fallthru
    _
  // Predicated region
  $region34: #{cnn_forward.1} parent=0 // pred_check
    _
  $region35: #{cnn_forward.1} parent=0 // pred_check_branch
    %572 = sbr.rel (0) target = $region37
  $region36: #{cnn_forward.1} parent=0 // pred_region
    _
  $region37: #{cnn_forward.1} parent=0 // pred_fallthru
    _

</llo_original>
